<compile_context>
chip_gen: v5e
topology: v5e:2x2
jax: 0.10.0
libtpu: 0.0.40
codegen_flags: <defaults>
</compile_context>

<pallas_src>
import jax
import jax.numpy as jnp
from jax.experimental import pallas as pl
from jax.experimental.pallas import tpu as pltpu

# Constants from the original `gaussian` module.
EPSILON = 1e-6      # gaussian.EPSILON (10e-7)
SIGMA_BOOST = 2.0   # gaussian.SIGMA_BOOST


# ----------------------------------------------------------------------------
# Pallas hot path: one stacked matmul + clamp per lane-dense feature tile
#   out[d*n:(d+1)*n, :] = clip(A_cum[d] @ x0_tile, 0, 1)
# ----------------------------------------------------------------------------
def _stacked_matmul_kernel(a_ref, x_ref, out_ref):
    # a_ref  : (depth*n, n)       cumulative adjacency products (grid-invariant)
    # x_ref  : (n, tile_f)        one lane-dense feature tile of x0
    # out_ref: (depth*n, tile_f)  clamped outputs of every depth step
    y = jnp.dot(a_ref[...], x_ref[...], preferred_element_type=jnp.float32)
    out_ref[...] = jnp.clip(y, 0.0, 1.0).astype(out_ref.dtype)


def _vmem_capacity_bytes():
    """Best-effort per-TensorCore VMEM capacity, conservative fallback."""
    try:
        return int(pltpu.get_tpu_info().vmem_capacity_bytes)
    except Exception:
        pass
    try:
        kind = jax.devices()[0].device_kind.lower()
    except Exception:
        kind = ""
    if "v7" in kind:
        return 64 << 20
    if any(t in kind for t in ("v2", "v3", "v4", "v5", "v6")):
        return 128 << 20
    return 64 << 20   # unknown part: assume the smallest (v7x per-TC)


def _choose_tile_f(F_pad, n, depth, in_itemsize, out_itemsize, budget):
    """Pick the feature tile width: prefer 2-4 tiles of >=512 lanes (output
    writeback of tile i overlaps compute of tile i+1; even tile count shards
    cleanly across v7x's two TensorCores); otherwise the largest tile that
    fits the VMEM budget."""
    m = F_pad // 128
    M = depth * n

    def vmem_bytes(tile_f):
        return (2 * M * n * in_itemsize           # A_cum slab (double-buffered)
                + 2 * n * tile_f * in_itemsize    # x tiles (double-buffered)
                + 2 * M * tile_f * out_itemsize   # out tiles (double-buffered)
                + 2 * M * tile_f * 4)             # live f32 matmul + clip slabs

    divisors = [d for d in range(1, m + 1) if m % d == 0]
    feasible = [nb for nb in divisors if vmem_bytes(F_pad // nb) <= budget]
    if not feasible:
        nb = m                                    # smallest (128-lane) tiles
    else:
        good = [nb for nb in feasible if 2 <= nb <= 4 and F_pad // nb >= 512]
        if good:
            # prefer tile_f <= 1024 (more pipeline stages, VMEM-friendlier),
            # then an even tile count (v7x megacore), then fewer grid steps.
            nb = sorted(good, key=lambda b: (F_pad // b > 1024, b % 2 != 0, b))[0]
        else:
            nb = min(feasible)                    # largest tile that fits
    return F_pad // nb, vmem_bytes(F_pad // nb)


def cumulative_adjacency(A_stack):
    """A_cum[d] = A_d @ A_{d-1} @ ... @ A_0, folded in full-precision f32.

    Valid because ConvModelFlat clamps only the returned copies: the value
    propagated to the next depth step is the UN-clamped matmul result."""
    depth = A_stack.shape[0]
    cums = [A_stack[0]]
    for d in range(1, depth):
        cums.append(jnp.dot(A_stack[d], cums[-1],
                            precision=jax.lax.Precision.HIGHEST))
    return jnp.stack(cums, axis=0)        # (depth, n, n) f32


def stacked_adj_matmul(A_cum, x, use_bf16=True, store_bf16=False):
    """out[d] = clip(A_cum[d] @ x, 0, 1) for every d, in ONE pallas_call."""
    depth, n, n2 = A_cum.shape
    assert n == n2 and x.shape[0] == n
    F = x.shape[1]

    # Lane-dense padding; bump odd 128-group counts to even when cheap (<=1/7
    # extra writeback) so the grid can always split 2-way (v7x megacore /
    # DMA-compute overlap).
    F_pad = ((F + 127) // 128) * 128
    if (F_pad // 128) % 2 == 1 and (F_pad // 128) >= 7:
        F_pad += 128
    if F_pad != F:
        x = jnp.pad(x, ((0, 0), (0, F_pad - F)))

    in_dtype = jnp.bfloat16 if use_bf16 else jnp.float32
    out_dtype = jnp.bfloat16 if store_bf16 else jnp.float32
    in_isz = jnp.dtype(in_dtype).itemsize
    out_isz = jnp.dtype(out_dtype).itemsize

    cap = _vmem_capacity_bytes()
    if cap <= (64 << 20):            # v7x-class: 64 MiB physical per TC
        budget, limit_cap = 20 << 20, 40 << 20
    else:                            # v5e / v6e: 128 MiB physical per TC
        budget, limit_cap = 96 << 20, 100 << 20

    tile_f, vmem_need = _choose_tile_f(F_pad, n, depth, in_isz, out_isz, budget)
    grid = (F_pad // tile_f,)
    vmem_limit = int(min(limit_cap, max(int(1.25 * vmem_need), 8 << 20)))
    vmem_limit = int(max(vmem_limit, vmem_need + (1 << 20)))

    M = depth * n
    a2d = A_cum.reshape(M, n).astype(in_dtype)

    cost = pl.CostEstimate(
        flops=2 * M * n * F_pad,
        transcendentals=0,
        bytes_accessed=M * n * in_isz + n * F_pad * in_isz + M * F_pad * out_isz)

    # TODO(synk): single-buffer the grid-invariant A_cum spec
    #   (pipeline_mode=pl.Buffered(1)) to reclaim its second VMEM buffer.
    # TODO(synk): for very large n the resident A_cum slab should switch to a
    #   contraction-tiled layout with an f32 accumulator + 'arbitrary' K axis.
    out = pl.pallas_call(
        _stacked_matmul_kernel,
        out_shape=jax.ShapeDtypeStruct((M, F_pad), out_dtype),
        grid_spec=pltpu.PrefetchScalarGridSpec(
            num_scalar_prefetch=0,
            grid=grid,
            in_specs=[pl.BlockSpec((M, n), lambda j: (0, 0)),        # A_cum resident
                      pl.BlockSpec((n, tile_f), lambda j: (0, j))],  # x tile
            out_specs=pl.BlockSpec((M, tile_f), lambda j: (0, j))),
        compiler_params=pltpu.CompilerParams(
            dimension_semantics=("parallel",),
            vmem_limit_bytes=vmem_limit),
        cost_estimate=cost,
    )(a2d, x.astype(in_dtype))

    out = out.reshape(depth, n, F_pad)
    if F_pad != F:
        out = out[:, :, :F]
    return out


# ----------------------------------------------------------------------------
# Hypernetwork glue (plain JAX, parameter-sized work only)
# ----------------------------------------------------------------------------
class MatrixHyperlayer:
    def __init__(self, in_num, out_num, k, radditional=0, gadditional=0,
                 region=(128,), sigma_scale=0.2, min_sigma=0.0, fix_value=False,
                 key=None):
        self.in_num = in_num
        self.out_num = out_num
        self.k = k
        self.radditional = radditional
        self.gadditional = gadditional
        self.region = region
        self.sigma_scale = sigma_scale
        self.min_sigma = min_sigma
        self.fix_value = fix_value
        # Parameter(torch.randn(k * out_num, 3)) -- deterministic in-script init
        self.params = jax.random.normal(key, (k * out_num, 3), dtype=jnp.float32)

    def hyper(self):
        p = self.params
        means = jax.nn.sigmoid(p[:, 0:1]) * (self.in_num - 1.0)
        sigmas = jax.nn.softplus(p[:, 1:2] + SIGMA_BOOST) + EPSILON
        sigmas = sigmas * float(self.in_num) * self.sigma_scale + self.min_sigma
        values = p[:, 2:3]
        if self.fix_value:
            values = values * 0.0 + 1.0 / self.k
        return means, sigmas, values

    def generate_integer_tuples(self, means, key):
        c, k, _ = means.shape  # rank == 1
        m = means[..., 0]
        # the two nearest integer neighbours of each mean
        neighbor_ints = jnp.stack([jnp.floor(m), jnp.ceil(m)],
                                  axis=2).astype(jnp.int32)            # (c,k,2)
        rngv = float(self.in_num)
        rrng = float(self.region[0])
        k1, k2 = jax.random.split(key)
        # uniform samples from a window around round(mean)
        rr = jax.random.uniform(k1, (c, k, self.radditional)) * (1.0 - EPSILON)
        mns = jnp.round(m)[:, :, None]
        lower = mns - rrng * 0.5
        upper = mns + rrng * 0.5
        lower = jnp.where(lower < 0.0, 0.0, lower)
        lower = jnp.where(upper > rngv, rngv - rrng, lower)
        rr_ints = (rr * rrng + lower).astype(jnp.int32)
        # uniform samples over the whole index range
        g = jax.random.uniform(k2, (c, k, self.gadditional)) * (1.0 - EPSILON) * rngv
        g_ints = g.astype(jnp.int32)
        ints = jnp.concatenate([neighbor_ints, rr_ints, g_ints], axis=2)
        return ints.reshape(c, -1)     # (c, k*(2+radd+gadd))

    @staticmethod
    def duplicates(idx):
        # mark every occurrence of an index value except the first one (per row)
        m = idx.shape[1]
        eq = idx[:, :, None] == idx[:, None, :]
        earlier = jnp.tril(jnp.ones((m, m), dtype=bool), k=-1)
        return jnp.any(eq & earlier[None, :, :], axis=2)

    @staticmethod
    def densities(points, means, sigmas):
        # points (c,n,1), means (c,k,1), sigmas (c,k,1) -> (c,n,k)
        p = points[:, :, None, :]
        mu = means[:, None, :, :]
        sg = sigmas[:, None, :, :]
        d = (p - mu) * jnp.sqrt(1.0 / (EPSILON + sg))
        prod = jnp.sum(d * d, axis=-1)
        return jnp.exp(-0.5 * prod)

    def adjacency(self, key, train=True):
        """Dense (out_num, in_num) matrix equivalent to what the original code
        hands to sparsemm (duplicate indices coalesced by summation)."""
        means, sigmas, values = self.hyper()
        c = self.out_num
        means = means.reshape(c, self.k, 1)
        sigmas = sigmas.reshape(c, self.k, 1)
        values = values.reshape(c, self.k)
        if train:
            indices = self.generate_integer_tuples(means, key)        # (c, n_ind)
            n_ind = indices.shape[1]
            indfl = indices.astype(jnp.float32)
            dups = self.duplicates(indices)
            props = self.densities(indfl[:, :, None], means, sigmas)  # (c,n_ind,k)
            props = jnp.where(dups[:, :, None], 0.0, props)
            props = props / jnp.sum(props, axis=1, keepdims=True)
            w = jnp.sum(props * values[:, None, :], axis=2)           # (c, n_ind)
            out_idx = jnp.repeat(jnp.arange(self.out_num), n_ind)
            in_idx = indices.reshape(-1)
            vals = w.reshape(-1)
        else:
            out_idx = jnp.repeat(jnp.arange(self.out_num), self.k)
            in_idx = jnp.round(means.reshape(-1)).astype(jnp.int32)
            vals = values.reshape(-1)
        vals = jnp.where(out_idx == in_idx, 0.0, vals)  # kill self-connections
        A = jnp.zeros((self.out_num, self.in_num), jnp.float32)
        A = A.at[out_idx, in_idx].add(vals)
        return A


class ConvModelFlat:
    def __init__(self, data_size, k, radd=128, gadd=128, range=16,
                 min_sigma=0.0, fix_value=False, key=None):
        n, c, h, w = data_size
        self.data_size = data_size
        self.adj = MatrixHyperlayer(n, n, k, radditional=radd, gadditional=gadd,
                                    min_sigma=min_sigma, region=(range,),
                                    fix_value=fix_value, key=key)

    def adjacency_stack(self, key, depth, train=True):
        As = []
        for _ in range(depth):
            key, sub = jax.random.split(key)
            As.append(self.adj.adjacency(sub, train=train))
        return jnp.stack(As, axis=0)          # (depth, n, n)

    def forward(self, data, key, depth=1, train=True, use_bf16=True,
                store_bf16=False):
        n = data.shape[0]
        x = data.reshape(n, -1)
        A_stack = self.adjacency_stack(key, depth, train=train)      # f32
        A_cum = cumulative_adjacency(A_stack)                        # f32, tiny
        # Single fused Pallas call: all depth outputs, clamped, one stacked matmul
        # per lane-dense feature tile.
        outs = stacked_adj_matmul(A_cum, x, use_bf16=use_bf16,
                                  store_bf16=store_bf16)             # (depth, n, F)
        return [outs[d].reshape(data.shape) for d in range(depth)]


# ----------------------------------------------------------------------------
if __name__ == "__main__":
    key = jax.random.PRNGKey(0)
    k_data, k_param, k_fwd = jax.random.split(key, 3)

    N, C, H, W = 16, 4, 16, 16          # F = C*H*W = 1024 -> 2 lane-dense tiles of 512
    data = jax.random.uniform(k_data, (N, C, H, W), dtype=jnp.float32)

    model = ConvModelFlat((N, C, H, W), k=2, radd=4, gadd=4, range=16,
                          key=k_param)

    depth = 2
    results = model.forward(data, k_fwd, depth=depth, train=True, use_bf16=True)
    results = [jax.block_until_ready(r) for r in results]
    assert len(results) == depth

    # ------------------------------------------------------------------
    # References (same key-split sequence -> identical adjacency matrices).
    # ------------------------------------------------------------------
    A_stack = model.adjacency_stack(k_fwd, depth, train=True)
    x0 = data.reshape(N, -1)
    hi = jax.lax.Precision.HIGHEST

    # True f32 chained reference: torch semantics (clamp only the returned copy,
    # propagate the un-clamped result).
    refs, x = [], x0
    for d in range(depth):
        x = jnp.dot(A_stack[d], x, precision=hi)
        refs.append(jnp.clip(x, 0.0, 1.0))

    A_cum = cumulative_adjacency(A_stack)

    # (a) default bf16-operand path: tight vs the bf16-operand mirror (same
    #     rounding + f32 accumulation), loose vs the true f32 chain.
    mirrors = [jnp.clip(jnp.dot(A_cum[d].astype(jnp.bfloat16),
                                x0.astype(jnp.bfloat16),
                                preferred_element_type=jnp.float32), 0.0, 1.0)
               for d in range(depth)]
    for d, r in enumerate(results):
        assert r.shape == data.shape and r.dtype == jnp.float32
        r2 = r.reshape(N, -1)
        err_mirror = float(jnp.max(jnp.abs(r2 - mirrors[d])))
        err_true = float(jnp.max(jnp.abs(r2 - refs[d])))
        assert err_mirror < 5e-3, err_mirror
        assert err_true < 1.5e-1, err_true

    # (b) pure f32 path vs the true f32 chained reference.
    outs_f32 = jax.block_until_ready(
        stacked_adj_matmul(A_cum, x0, use_bf16=False, store_bf16=False))
    for d in range(depth):
        err = float(jnp.max(jnp.abs(outs_f32[d] - refs[d])))
        assert err < 5e-2, err

    # (c) optional bf16 output store (halves the dominant HBM write stream).
    outs_b16 = jax.block_until_ready(
        stacked_adj_matmul(A_cum, x0, use_bf16=True, store_bf16=True))
    assert outs_b16.dtype == jnp.bfloat16
    for d in range(depth):
        err = float(jnp.max(jnp.abs(outs_b16[d].astype(jnp.float32) - refs[d])))
        assert err < 2.5e-1, err

    print("KERNEL_OK")
</pallas_src>

<mosaic_0001>
module attributes {stable_mosaic.version = 11 : i64} {
  func.func @_stacked_matmul_kernel(%arg0: i32, %arg1: memref<32x16xbf16, #tpu.memory_space<vmem>>, %arg2: memref<16x512xbf16, #tpu.memory_space<vmem>>, %arg3: memref<32x512xf32, #tpu.memory_space<vmem>>) attributes {dimension_semantics = [#tpu.dimension_semantics<parallel>], iteration_bounds = array<i64: 2>, scalar_prefetch = 0 : i64, scratch_operands = 0 : i64, tpu.core_type = #tpu.core_type<tc>, window_params = [{pipeline_mode = #tpu.pipeline_mode<synchronous>, transform_indices = @transform_0, window_bounds = array<i64: 32, 16>}, {transform_indices = @transform_1, window_bounds = array<i64: 16, 512>}, {transform_indices = @transform_2, window_bounds = array<i64: 32, 512>}]} {
    %c0 = arith.constant 0 : index
    %c0_0 = arith.constant 0 : index
    %0 = vector.load %arg1[%c0, %c0_0] : memref<32x16xbf16, #tpu.memory_space<vmem>>, vector<32x16xbf16>
    %c0_1 = arith.constant 0 : index
    %c0_2 = arith.constant 0 : index
    %1 = vector.load %arg2[%c0_1, %c0_2] : memref<16x512xbf16, #tpu.memory_space<vmem>>, vector<16x512xbf16>
    %cst = arith.constant dense<0.000000e+00> : vector<32x512xf32>
    %2 = tpu.matmul %0, %1, %cst {dimension_numbers = #tpu.dot_dimension_numbers<[1], [0], [0], [1], [0, 0, 1, 1], [], []>} : vector<32x16xbf16>, vector<16x512xbf16>, vector<32x512xf32> -> vector<32x512xf32>
    %cst_3 = arith.constant 0.000000e+00 : f32
    %cst_4 = arith.constant 1.000000e+00 : f32
    %3 = vector.broadcast %cst_3 : f32 to vector<32x512xf32>
    %4 = arith.maximumf %3, %2 : vector<32x512xf32>
    %5 = vector.broadcast %cst_4 : f32 to vector<32x512xf32>
    %6 = arith.minimumf %5, %4 : vector<32x512xf32>
    %c0_5 = arith.constant 0 : index
    %c0_6 = arith.constant 0 : index
    %7 = vector.load %arg3[%c0_5, %c0_6] : memref<32x512xf32, #tpu.memory_space<vmem>>, vector<32x512xf32>
    tpu.vector_store %arg3[%c0_5, %c0_6], %6 {strides = array<i32>} : memref<32x512xf32, #tpu.memory_space<vmem>>, vector<32x512xf32>,
    return
  }
  func.func @transform_0(%arg0: i32) -> (i32, i32) {
    %c0_i32 = arith.constant 0 : i32
    %c0_i32_0 = arith.constant 0 : i32
    %c0_i32_1 = arith.constant 0 : i32
    return %c0_i32, %c0_i32_0 : i32, i32
  }
  func.func @transform_1(%arg0: i32) -> (i32, i32) {
    %c0_i32 = arith.constant 0 : i32
    %c0_i32_0 = arith.constant 0 : i32
    return %c0_i32, %arg0 : i32, i32
  }
  func.func @transform_2(%arg0: i32) -> (i32, i32) {
    %c0_i32 = arith.constant 0 : i32
    %c0_i32_0 = arith.constant 0 : i32
    return %c0_i32, %arg0 : i32, i32
  }
}

</mosaic_0001>

<llo_original>
// kernel: tpu_custom_call.1
$region0: #{tpu_custom_call.1}
  #allocation0 [shape = 'u32[]', space=smem, size = 0x4, offset = 0x4, fixed_abs, tag = 'smem constant byte address 0x4 - core index']
  #allocation1 [shape = 'u32[72,128]{1,0:T(1,128)}', space=vmem, size = 0x9000, scoped, tag = 'internal scratch']
  %s0 = inlined_call_operand.vmem [shape: bf16[32,16], index: 0, kind: input, shape index: {}]
  %s1 = inlined_call_operand.hbm [shape: bf16[16,1024], index: 1, kind: input, shape index: {}]
  %s2 = inlined_call_operand.hbm [shape: f32[32,1024], index: 2, kind: output, shape index: {}]
  %s3 = sld [smem:[#allocation0]]
  $region45: #{tpu_custom_call.1} parent=0
    _
  %s5 = ssub.s32 1, %s3
  %s6 = scalar_select 0, %s5, %s3
  $region1: #{tpu_custom_call.1} parent=0
    #allocation2 [shape = 'u8[32768]{0}', space=vmem, size = 0x8000, scoped, tag = 'input window, operand 1']
    #allocation3 [shape = 's32[2]{0}', space=sflag, size = 0x8, scoped, tag = 'scoped memory for tpu_custom_call.1']
    #allocation4 [shape = 's32[2]{0}', space=sflag, size = 0x8, scoped, tag = 'scoped memory for tpu_custom_call.1']
    #allocation5 [shape = 'u8[131072]{0}', space=vmem, size = 0x20000, scoped, tag = 'output window, operand 0']
    %7 = vsyncpa [#allocation3], 0
    %s8 = scalar_lea.sflag [#allocation3], 1
    %9 = vsyncpa %s8, 0
    %10 = vsyncpa [#allocation4], 0
    %s11 = scalar_lea.sflag [#allocation4], 1
    %12 = vsyncpa %s11, 0
    loop: start=0, step=1, limit=4
    $region2: #{tpu_custom_call.1} parent=1 // loop_pre_header
      _
    $region3: #{tpu_custom_call.1} parent=1 // loop_header
      %s14 = sphi 0, %s18
      %p15 = scmp.ge.s32.totalorder %s14, 4
      %s22 = sphi 0, %s22
      %s24 = sphi 0, %s22
      %s25 = sphi 0, %s24
      %s39 = sphi 0, %s25
      %s45 = sphi 0, %s47
      %s48 = sphi 0, %s45
      %s49 = sphi 0, %s48
      %s65 = sphi 0, %s49
      %s71 = sphi 0, %s73
      %s74 = sphi 0, %s71
      %s75 = sphi 0, %s74
      %s91 = sphi 0, %s75
    $region4: #{tpu_custom_call.1} parent=1 // loop_header_branch
      %17 = sbr.rel (%p15) target = $region8
    $region5: #{tpu_custom_call.1} parent=1 // loop_body
      %s19 = ssub.s32 %s14, 1
      %s20 = ssub.s32 %s14, 2
      %s21 = sadd.s32 %s14, 1
      %s23 = sadd.s32 %s22, 1
      %p26 = scmp.eq.s32.totalorder %s14, 1
      %p27 = scmp.ne.s32.totalorder %s22, %s24
      %p28 = scmp.eq.s32.totalorder %s14, 0
      %p29 = por %p27, %p28
      %p30 = scmp.ne.s32.totalorder %s22, %s24
      %p31 = scmp.eq.s32.totalorder %s19, 1
      %p32 = por %p30, %p31
      %p33 = scmp.ne.s32.totalorder %s24, %s25
      %p34 = scmp.eq.s32.totalorder %s19, 0
      %p35 = por %p33, %p34
      %p36 = scmp.ne.s32.totalorder %s24, %s25
      %p37 = scmp.eq.s32.totalorder %s20, 1
      %p38 = por %p36, %p37
      %p40 = scmp.ne.s32.totalorder %s25, %s39
      %p41 = scmp.eq.s32.totalorder %s20, 0
      %p42 = por %p40, %p41
      %s43 = ssub.s32 %s14, %s21
      %p44 = scmp.eq.s32.totalorder %s43, 0
      %s46 = sadd.s32 %s45, 1
      %s47 = scalar_select %p44, %s45, %s46
      %p50 = pneg %p44
      %p51 = scmp.eq.s32.totalorder %s14, 1
      %p52 = por %p50, %p51
      %p53 = scmp.ne.s32.totalorder %s45, %s48
      %p54 = scmp.eq.s32.totalorder %s14, 0
      %p55 = por %p53, %p54
      %p56 = scmp.ne.s32.totalorder %s45, %s48
      %p57 = scmp.eq.s32.totalorder %s19, 1
      %p58 = por %p56, %p57
      %p59 = scmp.ne.s32.totalorder %s48, %s49
      %p60 = scmp.eq.s32.totalorder %s19, 0
      %p61 = por %p59, %p60
      %p62 = scmp.ne.s32.totalorder %s48, %s49
      %p63 = scmp.eq.s32.totalorder %s20, 1
      %p64 = por %p62, %p63
      %p66 = scmp.ne.s32.totalorder %s49, %s65
      %p67 = scmp.eq.s32.totalorder %s20, 0
      %p68 = por %p66, %p67
      %s69 = ssub.s32 %s14, %s21
      %p70 = scmp.eq.s32.totalorder %s69, 0
      %s72 = sadd.s32 %s71, 1
      %s73 = scalar_select %p70, %s71, %s72
      %p76 = pneg %p70
      %p77 = scmp.eq.s32.totalorder %s14, 1
      %p78 = por %p76, %p77
      %p79 = scmp.ne.s32.totalorder %s71, %s74
      %p80 = scmp.eq.s32.totalorder %s14, 0
      %p81 = por %p79, %p80
      %p82 = scmp.ne.s32.totalorder %s71, %s74
      %p83 = scmp.eq.s32.totalorder %s19, 1
      %p84 = por %p82, %p83
      %p85 = scmp.ne.s32.totalorder %s74, %s75
      %p86 = scmp.eq.s32.totalorder %s19, 0
      %p87 = por %p85, %p86
      %p88 = scmp.ne.s32.totalorder %s74, %s75
      %p89 = scmp.eq.s32.totalorder %s20, 1
      %p90 = por %p88, %p89
      %p92 = scmp.ne.s32.totalorder %s75, %s91
      %p93 = scmp.eq.s32.totalorder %s20, 0
      %p94 = por %p92, %p93
      %p95 = scmp.le.s32.totalorder 1, %s14
      %p96 = scmp.lt.s32.totalorder %s14, 3
      %p97 = pnand %p95, %p96
      %p98 = pneg %p97
      // Predicated region
      $region9: #{tpu_custom_call.1} parent=5 // pred_check
        _
      $region10: #{tpu_custom_call.1} parent=5 // pred_check_branch
        %100 = sbr.rel (%p97) target = $region12
      $region11: #{tpu_custom_call.1} parent=5 // pred_region
        %s101 = ssub.s32 %s14, 1
        // Predicated region
        $region13: #{tpu_custom_call.1} parent=11 // pred_check
          %p102 = pneg %p35
        $region14: #{tpu_custom_call.1} parent=11 // pred_check_branch
          %104 = sbr.rel (%p102) target = $region16
        $region15: #{tpu_custom_call.1} parent=11 // pred_region
          _
        $region16: #{tpu_custom_call.1} parent=11 // pred_fallthru
          _
      $region12: #{tpu_custom_call.1} parent=5 // pred_fallthru
        _
      %p105 = scmp.lt.s32.totalorder %s14, 2
      // Predicated region
      $region17: #{tpu_custom_call.1} parent=5 // pred_check
        %p106 = pneg %p105
      $region18: #{tpu_custom_call.1} parent=5 // pred_check_branch
        %108 = sbr.rel (%p106) target = $region20
      $region19: #{tpu_custom_call.1} parent=5 // pred_region
        // Predicated region
        $region21: #{tpu_custom_call.1} parent=19 // pred_check
          %p109 = pneg %p55
        $region22: #{tpu_custom_call.1} parent=19 // pred_check_branch
          %111 = sbr.rel (%p109) target = $region24
        $region23: #{tpu_custom_call.1} parent=19 // pred_region
          %s112 = sand.u32 %s45, 1
          %s113 = scalar_lea.sflag [#allocation3], %s112
          %s114 = sand.u32 %s45, 1
          %s115 = smul.addr %s114, 32
          %s116 = scalar_lea.vmem [#allocation2], %s115
          %s117 = smul.u32 4, %s14
          %119 = vsyncadd %s113, 0
          %s120 = smul.addr %s117, 4
          %s121 = scalar_lea.hbm %s1, %s120
          %s122 = sshll.u32 %s121, 4
          %s123 = int_to_ptr.hbm [resolvable:$true] %s122
          %s124 = sshll.u32 %s116, 4
          %s125 = int_to_ptr.vmem [resolvable:$true] %s124
          %130 = dma.hbm_to_vmem [thread:$0]  %s123, 512, %s125, %s113, 512, 256, 16
        $region24: #{tpu_custom_call.1} parent=19 // pred_fallthru
          _
      $region20: #{tpu_custom_call.1} parent=5 // pred_fallthru
        _
      %p131 = scmp.le.s32.totalorder 1, %s14
      %p132 = scmp.lt.s32.totalorder %s14, 3
      %p133 = pnand %p131, %p132
      %p134 = pneg %p133
      // Predicated region
      $region25: #{tpu_custom_call.1} parent=5 // pred_check
        _
      $region26: #{tpu_custom_call.1} parent=5 // pred_check_branch
        %136 = sbr.rel (%p133) target = $region28
      $region27: #{tpu_custom_call.1} parent=5 // pred_region
        %s137 = ssub.s32 %s14, 1
        %s138 = sand.u32 %s48, 1
        %s139 = scalar_lea.sflag [#allocation3], %s138
        %s140 = sand.u32 %s48, 1
        %s141 = smul.addr %s140, 32
        %s142 = scalar_lea.vmem [#allocation2], %s141
        // Predicated region
        $region29: #{tpu_custom_call.1} parent=27 // pred_check
          %p143 = pneg %p61
        $region30: #{tpu_custom_call.1} parent=27 // pred_check_branch
          %145 = sbr.rel (%p143) target = $region32
        $region31: #{tpu_custom_call.1} parent=27 // pred_region
          %147 = dma.done %s139, 512
        $region32: #{tpu_custom_call.1} parent=27 // pred_fallthru
          _
        %p148 = pneg %p35
        %p149 = pneg %p32
        %s150 = sand.u32 %s48, 1
        %s151 = scalar_lea.sflag [#allocation3], %s150
        %s152 = sand.u32 %s48, 1
        %s153 = smul.addr %s152, 32
        %s154 = scalar_lea.vmem [#allocation2], %s153
        %p155 = pneg %p61
        %p156 = pneg %p58
        %p157 = pneg %p87
        %p158 = pneg %p84
        %s159 = sand.u32 %s74, 1
        %s160 = scalar_lea.sflag [#allocation4], %s159
        %s161 = sand.u32 %s74, 1
        %s162 = smul.addr %s161, 128
        %s163 = scalar_lea.vmem [#allocation5], %s162
        %s164 = smul.u32 4, %s19
        %s165 = smul.u32 4, %s19
        %v167 = vld [vmem:[%s0] sm:$0xf]
        %v168 = vld [vmem:[%s0 + $0x4] sm:$0xf]
        %v169 = vld [vmem:[%s0 + $0x8] sm:$0xf]
        %v170 = vld [vmem:[%s0 + $0xc] sm:$0xf]
        %v171 = vld [vmem:[%s142] sm:$0xff]
        %v172 = vld [vmem:[%s142 + $0x8] sm:$0xff]
        %v173 = vld [vmem:[%s142 + $0x10] sm:$0xff]
        %v174 = vld [vmem:[%s142 + $0x18] sm:$0xff]
        %v179 = vunpack.c.l.b16 %v167
        %v180 = vunpack.c.l.b16 %v168
        %v181 = vunpack.c.l.b16 %v169
        %v182 = vunpack.c.l.b16 %v170
        %v183 = vpack.c.b16 %v180, %v179
        %v184 = vpack.c.b16 %v182, %v181
        %v189 = vunpack.c.l.b16 %v171
        %v190 = vunpack.c.h.b16 %v171
        %v191 = vunpack.c.l.b16 %v172
        %v192 = vunpack.c.h.b16 %v172
        %v193 = vunpack.c.l.b16 %v173
        %v194 = vunpack.c.h.b16 %v173
        %v195 = vunpack.c.l.b16 %v174
        %v196 = vunpack.c.h.b16 %v174
        %v197 = vpack.c.b16 %v193, %v189
        %v198 = vpack.c.b16 %v194, %v190
        %v199 = vpack.c.b16 %v195, %v191
        %v200 = vpack.c.b16 %v196, %v192
        %vm205 = vcmask 130048
        %v207 = vsel %vm205, %v183, 0
        %v210 = vsel %vm205, %v184, 0
        %212 = vmatpush.bf16.msra.mxu0 0
        %213 = vmatpush.bf16.msra.mxu0 0
        %214 = vmatpush.bf16.msra.mxu0 0
        %215 = vmatpush.bf16.msra.mxu0 0
        %216 = vmatpush.bf16.msra.mxu0 0
        %217 = vmatpush.bf16.msra.mxu0 0
        %218 = vmatpush.bf16.msra.mxu0 0
        %219 = vmatpush.bf16.msra.mxu0 %v197
        %220 = vmatmul.bf16.gmra.mxu0 %v207
        %v221 = vpop.f32.mrf.mxu0
        %v222 = vadd.f32 0.0, %v221
        %v223 = vpop.f32.mrf.mxu0
        %v224 = vadd.f32 0.0, %v223
        %225 = vmatmul.bf16.gmra.mxu0 %v210
        %v226 = vpop.f32.mrf.mxu0
        %v227 = vadd.f32 0.0, %v226
        %v228 = vpop.f32.mrf.mxu0
        %v229 = vadd.f32 0.0, %v228
        %230 = vdwg.mxu0
        %231 = vmatpush.bf16.msra.mxu0 0
        %232 = vmatpush.bf16.msra.mxu0 0
        %233 = vmatpush.bf16.msra.mxu0 0
        %234 = vmatpush.bf16.msra.mxu0 0
        %235 = vmatpush.bf16.msra.mxu0 0
        %236 = vmatpush.bf16.msra.mxu0 0
        %237 = vmatpush.bf16.msra.mxu0 0
        %238 = vmatpush.bf16.msra.mxu0 %v198
        %239 = vmatmul.bf16.gmra.mxu0 %v207
        %v240 = vpop.f32.mrf.mxu0
        %v241 = vadd.f32 0.0, %v240
        %v242 = vpop.f32.mrf.mxu0
        %v243 = vadd.f32 0.0, %v242
        %244 = vmatmul.bf16.gmra.mxu0 %v210
        %v245 = vpop.f32.mrf.mxu0
        %v246 = vadd.f32 0.0, %v245
        %v247 = vpop.f32.mrf.mxu0
        %v248 = vadd.f32 0.0, %v247
        %249 = vdwg.mxu0
        %250 = vmatpush.bf16.msra.mxu0 0
        %251 = vmatpush.bf16.msra.mxu0 0
        %252 = vmatpush.bf16.msra.mxu0 0
        %253 = vmatpush.bf16.msra.mxu0 0
        %254 = vmatpush.bf16.msra.mxu0 0
        %255 = vmatpush.bf16.msra.mxu0 0
        %256 = vmatpush.bf16.msra.mxu0 0
        %257 = vmatpush.bf16.msra.mxu0 %v199
        %258 = vmatmul.bf16.gmra.mxu0 %v207
        %v259 = vpop.f32.mrf.mxu0
        %v260 = vadd.f32 0.0, %v259
        %v261 = vpop.f32.mrf.mxu0
        %v262 = vadd.f32 0.0, %v261
        %263 = vmatmul.bf16.gmra.mxu0 %v210
        %v264 = vpop.f32.mrf.mxu0
        %v265 = vadd.f32 0.0, %v264
        %v266 = vpop.f32.mrf.mxu0
        %v267 = vadd.f32 0.0, %v266
        %268 = vdwg.mxu0
        %269 = vmatpush.bf16.msra.mxu0 0
        %270 = vmatpush.bf16.msra.mxu0 0
        %271 = vmatpush.bf16.msra.mxu0 0
        %272 = vmatpush.bf16.msra.mxu0 0
        %273 = vmatpush.bf16.msra.mxu0 0
        %274 = vmatpush.bf16.msra.mxu0 0
        %275 = vmatpush.bf16.msra.mxu0 0
        %276 = vmatpush.bf16.msra.mxu0 %v200
        %277 = vmatmul.bf16.gmra.mxu0 %v207
        %v278 = vpop.f32.mrf.mxu0
        %v279 = vadd.f32 0.0, %v278
        %v280 = vpop.f32.mrf.mxu0
        %v281 = vadd.f32 0.0, %v280
        %282 = vmatmul.bf16.gmra.mxu0 %v210
        %v283 = vpop.f32.mrf.mxu0
        %v284 = vadd.f32 0.0, %v283
        %v285 = vpop.f32.mrf.mxu0
        %v286 = vadd.f32 0.0, %v285
        %287 = vdwg.mxu0
        %v288 = vmax.f32 %v222, 0.0
        %v289 = vmax.f32 %v241, 0.0
        %v290 = vmax.f32 %v260, 0.0
        %v291 = vmax.f32 %v279, 0.0
        %v292 = vmax.f32 %v224, 0.0
        %v293 = vmax.f32 %v243, 0.0
        %v294 = vmax.f32 %v262, 0.0
        %v295 = vmax.f32 %v281, 0.0
        %v296 = vmax.f32 %v227, 0.0
        %v297 = vmax.f32 %v246, 0.0
        %v298 = vmax.f32 %v265, 0.0
        %v299 = vmax.f32 %v284, 0.0
        %v300 = vmax.f32 %v229, 0.0
        %v301 = vmax.f32 %v248, 0.0
        %v302 = vmax.f32 %v267, 0.0
        %v303 = vmax.f32 %v286, 0.0
        %v304 = vmin.f32 %v288, 1.0
        %v305 = vmin.f32 %v289, 1.0
        %v306 = vmin.f32 %v290, 1.0
        %v307 = vmin.f32 %v291, 1.0
        %v308 = vmin.f32 %v292, 1.0
        %v309 = vmin.f32 %v293, 1.0
        %v310 = vmin.f32 %v294, 1.0
        %v311 = vmin.f32 %v295, 1.0
        %v312 = vmin.f32 %v296, 1.0
        %v313 = vmin.f32 %v297, 1.0
        %v314 = vmin.f32 %v298, 1.0
        %v315 = vmin.f32 %v299, 1.0
        %v316 = vmin.f32 %v300, 1.0
        %v317 = vmin.f32 %v301, 1.0
        %v318 = vmin.f32 %v302, 1.0
        %v319 = vmin.f32 %v303, 1.0
        %320 = vst [vmem:[%s163] sm:$0xff] %v304
        %321 = vst [vmem:[%s163 + $0x8] sm:$0xff] %v305
        %322 = vst [vmem:[%s163 + $0x10] sm:$0xff] %v306
        %323 = vst [vmem:[%s163 + $0x18] sm:$0xff] %v307
        %324 = vst [vmem:[%s163 + $0x20] sm:$0xff] %v308
        %325 = vst [vmem:[%s163 + $0x28] sm:$0xff] %v309
        %326 = vst [vmem:[%s163 + $0x30] sm:$0xff] %v310
        %327 = vst [vmem:[%s163 + $0x38] sm:$0xff] %v311
        %328 = vst [vmem:[%s163 + $0x40] sm:$0xff] %v312
        %329 = vst [vmem:[%s163 + $0x48] sm:$0xff] %v313
        %330 = vst [vmem:[%s163 + $0x50] sm:$0xff] %v314
        %331 = vst [vmem:[%s163 + $0x58] sm:$0xff] %v315
        %332 = vst [vmem:[%s163 + $0x60] sm:$0xff] %v316
        %333 = vst [vmem:[%s163 + $0x68] sm:$0xff] %v317
        %334 = vst [vmem:[%s163 + $0x70] sm:$0xff] %v318
        %335 = vst [vmem:[%s163 + $0x78] sm:$0xff] %v319
        %s336 = sand.u32 %s74, 1
        %s337 = scalar_lea.sflag [#allocation4], %s336
        %s338 = sand.u32 %s74, 1
        %s339 = smul.addr %s338, 128
        %s340 = scalar_lea.vmem [#allocation5], %s339
        // Predicated region
        $region33: #{tpu_custom_call.1} parent=27 // pred_check
          %p341 = pneg %p84
        $region34: #{tpu_custom_call.1} parent=27 // pred_check_branch
          %343 = sbr.rel (%p341) target = $region36
        $region35: #{tpu_custom_call.1} parent=27 // pred_region
          %s344 = smul.u32 4, %s19
          %346 = vsyncadd %s337, 0
          %s347 = smul.addr %s344, 8
          %s348 = scalar_lea.hbm %s2, %s347
          %s349 = sshll.u32 %s340, 4
          %s350 = int_to_ptr.vmem [resolvable:$true] %s349
          %s351 = sshll.u32 %s348, 4
          %s352 = int_to_ptr.hbm [resolvable:$true] %s351
          %357 = dma.vmem_to_hbm [thread:$0]  %s350, 2048, %s352, %s337, 512, 1024, 32
        $region36: #{tpu_custom_call.1} parent=27 // pred_fallthru
          _
      $region28: #{tpu_custom_call.1} parent=5 // pred_fallthru
        _
      %p358 = scmp.le.s32.totalorder 2, %s14
      // Predicated region
      $region37: #{tpu_custom_call.1} parent=5 // pred_check
        %p359 = pneg %p358
      $region38: #{tpu_custom_call.1} parent=5 // pred_check_branch
        %361 = sbr.rel (%p359) target = $region40
      $region39: #{tpu_custom_call.1} parent=5 // pred_region
        %s362 = ssub.s32 %s14, 2
        // Predicated region
        $region41: #{tpu_custom_call.1} parent=39 // pred_check
          %p363 = pneg %p90
        $region42: #{tpu_custom_call.1} parent=39 // pred_check_branch
          %365 = sbr.rel (%p363) target = $region44
        $region43: #{tpu_custom_call.1} parent=39 // pred_region
          %s366 = sand.u32 %s75, 1
          %s367 = scalar_lea.sflag [#allocation4], %s366
          %s368 = sand.u32 %s75, 1
          %s369 = smul.addr %s368, 128
          %s370 = scalar_lea.vmem [#allocation5], %s369
          %372 = dma.done %s367, 2048
        $region44: #{tpu_custom_call.1} parent=39 // pred_fallthru
          _
      $region40: #{tpu_custom_call.1} parent=5 // pred_fallthru
        _
    $region6: #{tpu_custom_call.1} parent=1 // loop_footer
      %s18 = sadd.s32 1, %s14
    $region7: #{tpu_custom_call.1} parent=1 // loop_footer_branch
      %13 = sbr.rel target = $region3
    $region8: #{tpu_custom_call.1} parent=1 // loop_exit
      _
    %373 = vsyncpa [#allocation3], 1
    %s374 = scalar_lea.sflag [#allocation3], 1
    %375 = vsyncpa %s374, 1
    %376 = vsyncpa [#allocation4], 1
    %s377 = scalar_lea.sflag [#allocation4], 1
    %378 = vsyncpa %s377, 1

</llo_original>
